<compile_context>
chip_gen: v7x
topology: tpu7x:2x2x1
jax: 0.10.0
libtpu: 0.0.40
codegen_flags: <defaults>
</compile_context>

<pallas_src>
import jax
import jax.numpy as jnp
from jax.experimental import pallas as pl
from jax.experimental.pallas import tpu as pltpu


def _round_up(x, m):
    return ((x + m - 1) // m) * m


def _embed_kernel(idx_ref, w_ref, out_ref):
    # idx_ref : (TILE, 1)  int32   -- atom types for this tile of nodes
    # w_ref   : (T, D)     float32 -- full (padded) embedding table, VMEM-resident
    # out_ref : (TILE, D)  float32 -- gathered embeddings for this tile
    idx = idx_ref[...]                                        # (TILE, 1)
    tn = idx.shape[0]
    t = w_ref.shape[0]
    col = jax.lax.broadcasted_iota(jnp.int32, (tn, t), 1)     # (TILE, T)
    onehot = (col == idx).astype(w_ref.dtype)                 # (TILE, T)
    out_ref[...] = jnp.dot(
        onehot, w_ref[...], preferred_element_type=jnp.float32
    ).astype(out_ref.dtype)


def atom_embedding(atom_list, weight, *, tile_n=512, min_pallas_n=256):
    """Gather embedding rows for each atom (SchNet AtomEmbedding.forward).

    atom_list : int array [N]    (atomic numbers, 0 = padding)
    weight    : float   [T, D]   (row 0 is the zero padding row)
    returns   : float   [N, D]
    """
    n = atom_list.shape[0]
    t, d = weight.shape
    d_out = d

    # Tiny / empty graphs: the fixed pallas_call launch + pipeline prologue
    # dominates; plain XLA gather wins there on every generation.
    if n < min_pallas_n:
        return jnp.take(weight, atom_list.astype(jnp.int32), axis=0)

    # Keep the output last dim lane-dense (multiple of 128) to avoid masked
    # partial stores; pad feature columns if needed and slice them off after.
    if d % 128 != 0:
        d_pad = _round_up(d, 128)
        weight = jnp.pad(weight, ((0, 0), (0, d_pad - d)))
        d = d_pad
    # Keep the matmul contraction dim a clean multiple of 8 (static no-op for
    # tables built with make_embedding_table, which pads T to 128 already).
    if t % 8 != 0:
        t_pad = _round_up(t, 8)
        weight = jnp.pad(weight, ((0, t_pad - t), (0, 0)))
        t = t_pad

    # Tile selection: big tiles amortize the ~0.35us/step overhead and give a
    # lane-dense writeback; but always aim for >=2 grid steps so the
    # "parallel" axis can be split across v7x's two TensorCores.
    if n <= tile_n:
        tile = max(8, _round_up(pl.cdiv(n, 2), 8))
    else:
        tile = tile_n
    n_tiles = pl.cdiv(n, tile)
    n_pad = n_tiles * tile

    # Pad indices with 0 (the all-zero padding row) up to the tile boundary.
    # The output itself is NOT padded: Pallas masks the store of the partial
    # boundary block, so only n rows are ever written to HBM.
    idx2d = jnp.pad(atom_list.astype(jnp.int32), (0, n_pad - n))[:, None]

    cost = pl.CostEstimate(
        flops=2 * n_pad * t * d,
        transcendentals=0,
        bytes_accessed=n * d * 4 + n_pad * 4 + t * d * 4,
    )

    out = pl.pallas_call(
        _embed_kernel,
        out_shape=jax.ShapeDtypeStruct((n, d), weight.dtype),
        grid=(n_tiles,),
        in_specs=[
            pl.BlockSpec((tile, 1), lambda i: (i, 0)),   # per-tile indices
            pl.BlockSpec((t, d), lambda i: (0, 0)),      # full table, resident
        ],
        out_specs=pl.BlockSpec((tile, d), lambda i: (i, 0)),
        compiler_params=pltpu.CompilerParams(
            dimension_semantics=("parallel",)
        ),
        cost_estimate=cost,
    )(idx2d, weight)

    if d_out != d:
        out = out[:, :d_out]
    return out


def make_embedding_table(key, type_num=100, dim=128):
    """Deterministic stand-in for nn.Embedding(type_num, dim, padding_idx=0):
    rows ~ N(0, 1), row 0 zeroed. Padded along the type axis to the next
    multiple of 128 so the table tiles cleanly; extra rows are zero and never
    indexed."""
    w = jax.random.normal(key, (type_num, dim), dtype=jnp.float32)
    w = w.at[0].set(0.0)                        # padding_idx=0 -> zero row
    t_pad = _round_up(type_num, 128)
    w_padded = jnp.zeros((t_pad, dim), dtype=jnp.float32).at[:type_num].set(w)
    return w_padded


if __name__ == "__main__":
    key = jax.random.PRNGKey(0)
    k_w, k_w2, k_idx = jax.random.split(key, 3)

    dim = 128        # default embedding dim of the module
    type_num = 100   # default max atomic number
    n_atoms = 1000   # 2 tiles of 512 -> exercises the parallel grid and the
                     # partial (masked) boundary output block

    weight = make_embedding_table(k_w, type_num=type_num, dim=dim)

    # Synthetic g.ndata['node_type']: atomic numbers in [0, type_num),
    # include a zero to exercise padding_idx behaviour.
    atom_list = jax.random.randint(k_idx, (n_atoms,), 0, type_num, dtype=jnp.int32)
    atom_list = atom_list.at[3].set(0)

    out = jax.block_until_ready(atom_embedding(atom_list, weight))
    ref = jnp.take(weight, atom_list, axis=0)   # what nn.Embedding.forward does
    assert out.shape == (n_atoms, dim)
    assert jnp.allclose(out, ref, atol=1e-6), "mismatch vs reference gather"
    assert jnp.allclose(out[3], 0.0), "padding_idx row must be zero"

    # D not a multiple of 128 (common SchNet dim=64): column-padded lane-dense path.
    weight64 = make_embedding_table(k_w2, type_num=type_num, dim=64)
    out64 = jax.block_until_ready(atom_embedding(atom_list[:300], weight64))
    ref64 = jnp.take(weight64, atom_list[:300], axis=0)
    assert out64.shape == (300, 64)
    assert jnp.allclose(out64, ref64, atol=1e-6), "mismatch on D=64 path"

    # Tiny graph -> XLA fast path; empty graph edge case.
    small = jax.block_until_ready(atom_embedding(atom_list[:7], weight))
    assert jnp.allclose(small, ref[:7], atol=1e-6)
    empty = jax.block_until_ready(atom_embedding(atom_list[:0], weight))
    assert empty.shape == (0, dim)

    print("KERNEL_OK")
</pallas_src>

<mosaic_0001>
module attributes {stable_mosaic.version = 11 : i64} {
  func.func @_embed_kernel(%arg0: i32, %arg1: memref<512x1xi32, #tpu.memory_space<vmem>>, %arg2: memref<128x128xf32, #tpu.memory_space<vmem>>, %arg3: memref<512x128xf32, #tpu.memory_space<vmem>>) attributes {dimension_semantics = [#tpu.dimension_semantics<parallel>], iteration_bounds = array<i64: 2>, scalar_prefetch = 0 : i64, scratch_operands = 0 : i64, tpu.core_type = #tpu.core_type<tc>, window_params = [{transform_indices = @transform_0, window_bounds = array<i64: 512, 1>}, {pipeline_mode = #tpu.pipeline_mode<synchronous>, transform_indices = @transform_1, window_bounds = array<i64: 128, 128>}, {transform_indices = @transform_2, window_bounds = array<i64: 512, 128>}]} {
    %c0 = arith.constant 0 : index
    %c0_0 = arith.constant 0 : index
    %0 = vector.load %arg1[%c0, %c0_0] : memref<512x1xi32, #tpu.memory_space<vmem>>, vector<512x1xi32>
    %1 = tpu.iota {dimensions = array<i32: 1>} : vector<512x128xi32>
    %2 = vector.broadcast %0 : vector<512x1xi32> to vector<512x128xi32>
    %3 = arith.cmpi eq, %1, %2 : vector<512x128xi32>
    %4 = arith.extui %3 : vector<512x128xi1> to vector<512x128xi32>
    %5 = arith.sitofp %4 : vector<512x128xi32> to vector<512x128xf32>
    %c0_1 = arith.constant 0 : index
    %c0_2 = arith.constant 0 : index
    %6 = vector.load %arg2[%c0_1, %c0_2] : memref<128x128xf32, #tpu.memory_space<vmem>>, vector<128x128xf32>
    %cst = arith.constant dense<0.000000e+00> : vector<512x128xf32>
    %7 = tpu.matmul %5, %6, %cst {dimension_numbers = #tpu.dot_dimension_numbers<[1], [0], [0], [1], [0, 0, 1, 1], [], []>} : vector<512x128xf32>, vector<128x128xf32>, vector<512x128xf32> -> vector<512x128xf32>
    %c0_3 = arith.constant 0 : index
    %c0_4 = arith.constant 0 : index
    %8 = vector.load %arg3[%c0_3, %c0_4] : memref<512x128xf32, #tpu.memory_space<vmem>>, vector<512x128xf32>
    tpu.vector_store %arg3[%c0_3, %c0_4], %7 {strides = array<i32>} : memref<512x128xf32, #tpu.memory_space<vmem>>, vector<512x128xf32>,
    return
  }
  func.func @transform_0(%arg0: i32) -> (i32, i32) {
    %c0_i32 = arith.constant 0 : i32
    %c0_i32_0 = arith.constant 0 : i32
    return %arg0, %c0_i32 : i32, i32
  }
  func.func @transform_1(%arg0: i32) -> (i32, i32) {
    %c0_i32 = arith.constant 0 : i32
    %c0_i32_0 = arith.constant 0 : i32
    %c0_i32_1 = arith.constant 0 : i32
    return %c0_i32, %c0_i32_0 : i32, i32
  }
  func.func @transform_2(%arg0: i32) -> (i32, i32) {
    %c0_i32 = arith.constant 0 : i32
    %c0_i32_0 = arith.constant 0 : i32
    return %arg0, %c0_i32 : i32, i32
  }
}

</mosaic_0001>

<llo_original>
// kernel: tpu_custom_call.1
$region0: #{tpu_custom_call.1}
  #allocation0 [shape = 'u32[]', space=smem, size = 0x4, offset = 0x4, fixed_abs, tag = 'smem constant byte address 0x4 - core index']
  #allocation1 [shape = 'u32[144,128]{1,0:T(1,128)}', space=vmem, size = 0x12000, scoped, tag = 'internal scratch']
  %s0 = inlined_call_operand.vmem [shape: s32[1024,1], index: 0, kind: input, shape index: {}]
  %s1 = inlined_call_operand.vmem [shape: f32[128,128], index: 1, kind: input, shape index: {}]
  %s2 = inlined_call_operand.hbm [shape: f32[1000,128], index: 2, kind: output, shape index: {}]
  %s3 = sld [smem:[#allocation0]]
  $region41: #{tpu_custom_call.1} parent=0
    _
  %s5 = ssub.s32 1, %s3
  %s6 = scalar_select 0, %s5, %s3
  $region1: #{tpu_custom_call.1} parent=0
    #allocation2 [shape = 'u8[524288]{0}', space=vmem, size = 0x80000, scoped, tag = 'output window, operand 0']
    #allocation3 [shape = 's32[2]{0}', space=sflag, size = 0x8, scoped, tag = 'scoped memory for tpu_custom_call.1']
    %7 = vsyncpa [#allocation3], 0
    %s8 = scalar_lea.sflag [#allocation3], 1
    %9 = vsyncpa %s8, 0
    loop: start=0, step=1, limit=4
    $region2: #{tpu_custom_call.1} parent=1 // loop_pre_header
      _
    $region3: #{tpu_custom_call.1} parent=1 // loop_header
      %s11 = sphi 0, %s15
      %p12 = scmp.ge.s32.totalorder %s11, 4
      %s21 = sphi 0, %s23
      %s24 = sphi 0, %s21
      %s25 = sphi 0, %s24
      %s41 = sphi 0, %s25
      %s45 = sphi 0, %s45
      %s47 = sphi 0, %s45
      %s48 = sphi 0, %s47
      %s62 = sphi 0, %s48
      %s68 = sphi 0, %s70
      %s71 = sphi 0, %s68
      %s72 = sphi 0, %s71
      %s88 = sphi 0, %s72
    $region4: #{tpu_custom_call.1} parent=1 // loop_header_branch
      %14 = sbr.rel (%p12) target = $region8
    $region5: #{tpu_custom_call.1} parent=1 // loop_body
      %s16 = ssub.s32 %s11, 1
      %s17 = ssub.s32 %s11, 2
      %s18 = sadd.s32 %s11, 1
      %s19 = ssub.s32 %s11, %s18
      %p20 = scmp.eq.s32.totalorder %s19, 0
      %s22 = sadd.s32 %s21, 1
      %s23 = scalar_select %p20, %s21, %s22
      %p26 = pneg %p20
      %p27 = scmp.eq.s32.totalorder %s11, 1
      %p28 = por %p26, %p27
      %p29 = scmp.ne.s32.totalorder %s21, %s24
      %p30 = scmp.eq.s32.totalorder %s11, 0
      %p31 = por %p29, %p30
      %p32 = scmp.ne.s32.totalorder %s21, %s24
      %p33 = scmp.eq.s32.totalorder %s16, 1
      %p34 = por %p32, %p33
      %p35 = scmp.ne.s32.totalorder %s24, %s25
      %p36 = scmp.eq.s32.totalorder %s16, 0
      %p37 = por %p35, %p36
      %p38 = scmp.ne.s32.totalorder %s24, %s25
      %p39 = scmp.eq.s32.totalorder %s17, 1
      %p40 = por %p38, %p39
      %p42 = scmp.ne.s32.totalorder %s25, %s41
      %p43 = scmp.eq.s32.totalorder %s17, 0
      %p44 = por %p42, %p43
      %s46 = sadd.s32 %s45, 1
      %p49 = scmp.eq.s32.totalorder %s11, 1
      %p50 = scmp.ne.s32.totalorder %s45, %s47
      %p51 = scmp.eq.s32.totalorder %s11, 0
      %p52 = por %p50, %p51
      %p53 = scmp.ne.s32.totalorder %s45, %s47
      %p54 = scmp.eq.s32.totalorder %s16, 1
      %p55 = por %p53, %p54
      %p56 = scmp.ne.s32.totalorder %s47, %s48
      %p57 = scmp.eq.s32.totalorder %s16, 0
      %p58 = por %p56, %p57
      %p59 = scmp.ne.s32.totalorder %s47, %s48
      %p60 = scmp.eq.s32.totalorder %s17, 1
      %p61 = por %p59, %p60
      %p63 = scmp.ne.s32.totalorder %s48, %s62
      %p64 = scmp.eq.s32.totalorder %s17, 0
      %p65 = por %p63, %p64
      %s66 = ssub.s32 %s11, %s18
      %p67 = scmp.eq.s32.totalorder %s66, 0
      %s69 = sadd.s32 %s68, 1
      %s70 = scalar_select %p67, %s68, %s69
      %p73 = pneg %p67
      %p74 = scmp.eq.s32.totalorder %s11, 1
      %p75 = por %p73, %p74
      %p76 = scmp.ne.s32.totalorder %s68, %s71
      %p77 = scmp.eq.s32.totalorder %s11, 0
      %p78 = por %p76, %p77
      %p79 = scmp.ne.s32.totalorder %s68, %s71
      %p80 = scmp.eq.s32.totalorder %s16, 1
      %p81 = por %p79, %p80
      %p82 = scmp.ne.s32.totalorder %s71, %s72
      %p83 = scmp.eq.s32.totalorder %s16, 0
      %p84 = por %p82, %p83
      %p85 = scmp.ne.s32.totalorder %s71, %s72
      %p86 = scmp.eq.s32.totalorder %s17, 1
      %p87 = por %p85, %p86
      %p89 = scmp.ne.s32.totalorder %s72, %s88
      %p90 = scmp.eq.s32.totalorder %s17, 0
      %p91 = por %p89, %p90
      %p92 = scmp.le.s32.totalorder 1, %s11
      %p93 = scmp.lt.s32.totalorder %s11, 3
      %p94 = pnand %p92, %p93
      %p95 = pneg %p94
      // Predicated region
      $region9: #{tpu_custom_call.1} parent=5 // pred_check
        _
      $region10: #{tpu_custom_call.1} parent=5 // pred_check_branch
        %97 = sbr.rel (%p94) target = $region12
      $region11: #{tpu_custom_call.1} parent=5 // pred_region
        %s98 = ssub.s32 %s11, 1
        // Predicated region
        $region13: #{tpu_custom_call.1} parent=11 // pred_check
          %p99 = pneg %p58
        $region14: #{tpu_custom_call.1} parent=11 // pred_check_branch
          %101 = sbr.rel (%p99) target = $region16
        $region15: #{tpu_custom_call.1} parent=11 // pred_region
          _
        $region16: #{tpu_custom_call.1} parent=11 // pred_fallthru
          _
      $region12: #{tpu_custom_call.1} parent=5 // pred_fallthru
        _
      %p102 = scmp.lt.s32.totalorder %s11, 2
      // Predicated region
      $region17: #{tpu_custom_call.1} parent=5 // pred_check
        %p103 = pneg %p102
      $region18: #{tpu_custom_call.1} parent=5 // pred_check_branch
        %105 = sbr.rel (%p103) target = $region20
      $region19: #{tpu_custom_call.1} parent=5 // pred_region
        // Predicated region
        $region21: #{tpu_custom_call.1} parent=19 // pred_check
          %p106 = pneg %p31
        $region22: #{tpu_custom_call.1} parent=19 // pred_check_branch
          %108 = sbr.rel (%p106) target = $region24
        $region23: #{tpu_custom_call.1} parent=19 // pred_region
          %s109 = smul.u32 64, %s11
          %p110 = scmp.lt.s32.totalorder %s109, 127
          %s111 = scalar_select %p110, %s109, 127
          %s112 = smul.addr %s111, 8
          %s113 = scalar_lea.vmem %s0, %s112
          %s114 = smul.u32 64, %s11
        $region24: #{tpu_custom_call.1} parent=19 // pred_fallthru
          _
      $region20: #{tpu_custom_call.1} parent=5 // pred_fallthru
        _
      %p115 = scmp.le.s32.totalorder 1, %s11
      %p116 = scmp.lt.s32.totalorder %s11, 3
      %p117 = pnand %p115, %p116
      %p118 = pneg %p117
      // Predicated region
      $region25: #{tpu_custom_call.1} parent=5 // pred_check
        _
      $region26: #{tpu_custom_call.1} parent=5 // pred_check_branch
        %120 = sbr.rel (%p117) target = $region28
      $region27: #{tpu_custom_call.1} parent=5 // pred_region
        %s121 = ssub.s32 %s11, 1
        %s122 = smul.u32 64, %s16
        %p123 = scmp.lt.s32.totalorder %s122, 127
        %s124 = scalar_select %p123, %s122, 127
        %s125 = smul.addr %s124, 8
        %s126 = scalar_lea.vmem %s0, %s125
        %p127 = pneg %p37
        %p128 = pneg %p34
        %p129 = pneg %p58
        %p130 = pneg %p55
        %p131 = pneg %p84
        %p132 = pneg %p81
        %s133 = sand.u32 %s71, 1
        %s134 = scalar_lea.sflag [#allocation3], %s133
        %s135 = sand.u32 %s71, 1
        %s136 = smul.addr %s135, 512
        %s137 = scalar_lea.vmem [#allocation2], %s136
        %s138 = smul.u32 64, %s16
        %p139 = scmp.lt.s32.totalorder %s138, 127
        %s140 = scalar_select %p139, %s138, 127
        %s141 = smul.addr %s140, 8
        %s142 = scalar_lea.vmem %s0, %s141
        %s143 = smul.u32 64, %s16
        %s144 = smul.u32 64, %s16
        %s145 = ssub.s32 125, %s144
        %p146 = scmp.lt.s32.totalorder %s145, 64
        %s147 = scalar_select %p146, %s145, 64
        %s148 = smul.u32 128, %s147
        %v149 = vld [vmem:[%s142] sm:$0xff]
        %v150 = vld [vmem:[%s142 + $0x8] sm:$0xff]
        %v151 = vld [vmem:[%s142 + $0x10] sm:$0xff]
        %v152 = vld [vmem:[%s142 + $0x18] sm:$0xff]
        %v153 = vld [vmem:[%s142 + $0x20] sm:$0xff]
        %v154 = vld [vmem:[%s142 + $0x28] sm:$0xff]
        %v155 = vld [vmem:[%s142 + $0x30] sm:$0xff]
        %v156 = vld [vmem:[%s142 + $0x38] sm:$0xff]
        %v157 = vld [vmem:[%s142 + $0x40] sm:$0xff]
        %v158 = vld [vmem:[%s142 + $0x48] sm:$0xff]
        %v159 = vld [vmem:[%s142 + $0x50] sm:$0xff]
        %v160 = vld [vmem:[%s142 + $0x58] sm:$0xff]
        %v161 = vld [vmem:[%s142 + $0x60] sm:$0xff]
        %v162 = vld [vmem:[%s142 + $0x68] sm:$0xff]
        %v163 = vld [vmem:[%s142 + $0x70] sm:$0xff]
        %v164 = vld [vmem:[%s142 + $0x78] sm:$0xff]
        %v165 = vld [vmem:[%s142 + $0x80] sm:$0xff]
        %v166 = vld [vmem:[%s142 + $0x88] sm:$0xff]
        %v167 = vld [vmem:[%s142 + $0x90] sm:$0xff]
        %v168 = vld [vmem:[%s142 + $0x98] sm:$0xff]
        %v169 = vld [vmem:[%s142 + $0xa0] sm:$0xff]
        %v170 = vld [vmem:[%s142 + $0xa8] sm:$0xff]
        %v171 = vld [vmem:[%s142 + $0xb0] sm:$0xff]
        %v172 = vld [vmem:[%s142 + $0xb8] sm:$0xff]
        %v173 = vld [vmem:[%s142 + $0xc0] sm:$0xff]
        %v174 = vld [vmem:[%s142 + $0xc8] sm:$0xff]
        %v175 = vld [vmem:[%s142 + $0xd0] sm:$0xff]
        %v176 = vld [vmem:[%s142 + $0xd8] sm:$0xff]
        %v177 = vld [vmem:[%s142 + $0xe0] sm:$0xff]
        %v178 = vld [vmem:[%s142 + $0xe8] sm:$0xff]
        %v179 = vld [vmem:[%s142 + $0xf0] sm:$0xff]
        %v180 = vld [vmem:[%s142 + $0xf8] sm:$0xff]
        %v181 = vld [vmem:[%s142 + $0x100] sm:$0xff]
        %v182 = vld [vmem:[%s142 + $0x108] sm:$0xff]
        %v183 = vld [vmem:[%s142 + $0x110] sm:$0xff]
        %v184 = vld [vmem:[%s142 + $0x118] sm:$0xff]
        %v185 = vld [vmem:[%s142 + $0x120] sm:$0xff]
        %v186 = vld [vmem:[%s142 + $0x128] sm:$0xff]
        %v187 = vld [vmem:[%s142 + $0x130] sm:$0xff]
        %v188 = vld [vmem:[%s142 + $0x138] sm:$0xff]
        %v189 = vld [vmem:[%s142 + $0x140] sm:$0xff]
        %v190 = vld [vmem:[%s142 + $0x148] sm:$0xff]
        %v191 = vld [vmem:[%s142 + $0x150] sm:$0xff]
        %v192 = vld [vmem:[%s142 + $0x158] sm:$0xff]
        %v193 = vld [vmem:[%s142 + $0x160] sm:$0xff]
        %v194 = vld [vmem:[%s142 + $0x168] sm:$0xff]
        %v195 = vld [vmem:[%s142 + $0x170] sm:$0xff]
        %v196 = vld [vmem:[%s142 + $0x178] sm:$0xff]
        %v197 = vld [vmem:[%s142 + $0x180] sm:$0xff]
        %v198 = vld [vmem:[%s142 + $0x188] sm:$0xff]
        %v199 = vld [vmem:[%s142 + $0x190] sm:$0xff]
        %v200 = vld [vmem:[%s142 + $0x198] sm:$0xff]
        %v201 = vld [vmem:[%s142 + $0x1a0] sm:$0xff]
        %v202 = vld [vmem:[%s142 + $0x1a8] sm:$0xff]
        %v203 = vld [vmem:[%s142 + $0x1b0] sm:$0xff]
        %v204 = vld [vmem:[%s142 + $0x1b8] sm:$0xff]
        %v205 = vld [vmem:[%s142 + $0x1c0] sm:$0xff]
        %v206 = vld [vmem:[%s142 + $0x1c8] sm:$0xff]
        %v207 = vld [vmem:[%s142 + $0x1d0] sm:$0xff]
        %v208 = vld [vmem:[%s142 + $0x1d8] sm:$0xff]
        %v209 = vld [vmem:[%s142 + $0x1e0] sm:$0xff]
        %v210 = vld [vmem:[%s142 + $0x1e8] sm:$0xff]
        %v211 = vld [vmem:[%s142 + $0x1f0] sm:$0xff]
        %v212 = vld [vmem:[%s142 + $0x1f8] sm:$0xff]
        %v213 = vlaneseq
        %v214 = vand.u32 %v213, 127
        %215 = vset.pattern.permute.xlu0 0
        %216 = vperm.xlu0 %215, %v149
        %v217 = vpop.permute.xlu0 %216
        %218 = vset.pattern.permute.xlu0 0
        %219 = vperm.xlu0 %218, %v150
        %v220 = vpop.permute.xlu0 %219
        %221 = vset.pattern.permute.xlu0 0
        %222 = vperm.xlu0 %221, %v151
        %v223 = vpop.permute.xlu0 %222
        %224 = vset.pattern.permute.xlu0 0
        %225 = vperm.xlu0 %224, %v152
        %v226 = vpop.permute.xlu0 %225
        %227 = vset.pattern.permute.xlu0 0
        %228 = vperm.xlu0 %227, %v153
        %v229 = vpop.permute.xlu0 %228
        %230 = vset.pattern.permute.xlu0 0
        %231 = vperm.xlu0 %230, %v154
        %v232 = vpop.permute.xlu0 %231
        %233 = vset.pattern.permute.xlu0 0
        %234 = vperm.xlu0 %233, %v155
        %v235 = vpop.permute.xlu0 %234
        %236 = vset.pattern.permute.xlu0 0
        %237 = vperm.xlu0 %236, %v156
        %v238 = vpop.permute.xlu0 %237
        %239 = vset.pattern.permute.xlu0 0
        %240 = vperm.xlu0 %239, %v157
        %v241 = vpop.permute.xlu0 %240
        %242 = vset.pattern.permute.xlu0 0
        %243 = vperm.xlu0 %242, %v158
        %v244 = vpop.permute.xlu0 %243
        %245 = vset.pattern.permute.xlu0 0
        %246 = vperm.xlu0 %245, %v159
        %v247 = vpop.permute.xlu0 %246
        %248 = vset.pattern.permute.xlu0 0
        %249 = vperm.xlu0 %248, %v160
        %v250 = vpop.permute.xlu0 %249
        %251 = vset.pattern.permute.xlu0 0
        %252 = vperm.xlu0 %251, %v161
        %v253 = vpop.permute.xlu0 %252
        %254 = vset.pattern.permute.xlu0 0
        %255 = vperm.xlu0 %254, %v162
        %v256 = vpop.permute.xlu0 %255
        %257 = vset.pattern.permute.xlu0 0
        %258 = vperm.xlu0 %257, %v163
        %v259 = vpop.permute.xlu0 %258
        %260 = vset.pattern.permute.xlu0 0
        %261 = vperm.xlu0 %260, %v164
        %v262 = vpop.permute.xlu0 %261
        %263 = vset.pattern.permute.xlu0 0
        %264 = vperm.xlu0 %263, %v165
        %v265 = vpop.permute.xlu0 %264
        %266 = vset.pattern.permute.xlu0 0
        %267 = vperm.xlu0 %266, %v166
        %v268 = vpop.permute.xlu0 %267
        %269 = vset.pattern.permute.xlu0 0
        %270 = vperm.xlu0 %269, %v167
        %v271 = vpop.permute.xlu0 %270
        %272 = vset.pattern.permute.xlu0 0
        %273 = vperm.xlu0 %272, %v168
        %v274 = vpop.permute.xlu0 %273
        %275 = vset.pattern.permute.xlu0 0
        %276 = vperm.xlu0 %275, %v169
        %v277 = vpop.permute.xlu0 %276
        %278 = vset.pattern.permute.xlu0 0
        %279 = vperm.xlu0 %278, %v170
        %v280 = vpop.permute.xlu0 %279
        %281 = vset.pattern.permute.xlu0 0
        %282 = vperm.xlu0 %281, %v171
        %v283 = vpop.permute.xlu0 %282
        %284 = vset.pattern.permute.xlu0 0
        %285 = vperm.xlu0 %284, %v172
        %v286 = vpop.permute.xlu0 %285
        %287 = vset.pattern.permute.xlu0 0
        %288 = vperm.xlu0 %287, %v173
        %v289 = vpop.permute.xlu0 %288
        %290 = vset.pattern.permute.xlu0 0
        %291 = vperm.xlu0 %290, %v174
        %v292 = vpop.permute.xlu0 %291
        %293 = vset.pattern.permute.xlu0 0
        %294 = vperm.xlu0 %293, %v175
        %v295 = vpop.permute.xlu0 %294
        %296 = vset.pattern.permute.xlu0 0
        %297 = vperm.xlu0 %296, %v176
        %v298 = vpop.permute.xlu0 %297
        %299 = vset.pattern.permute.xlu0 0
        %300 = vperm.xlu0 %299, %v177
        %v301 = vpop.permute.xlu0 %300
        %302 = vset.pattern.permute.xlu0 0
        %303 = vperm.xlu0 %302, %v178
        %v304 = vpop.permute.xlu0 %303
        %305 = vset.pattern.permute.xlu0 0
        %306 = vperm.xlu0 %305, %v179
        %v307 = vpop.permute.xlu0 %306
        %308 = vset.pattern.permute.xlu0 0
        %309 = vperm.xlu0 %308, %v180
        %v310 = vpop.permute.xlu0 %309
        %311 = vset.pattern.permute.xlu0 0
        %312 = vperm.xlu0 %311, %v181
        %v313 = vpop.permute.xlu0 %312
        %314 = vset.pattern.permute.xlu0 0
        %315 = vperm.xlu0 %314, %v182
        %v316 = vpop.permute.xlu0 %315
        %317 = vset.pattern.permute.xlu0 0
        %318 = vperm.xlu0 %317, %v183
        %v319 = vpop.permute.xlu0 %318
        %320 = vset.pattern.permute.xlu0 0
        %321 = vperm.xlu0 %320, %v184
        %v322 = vpop.permute.xlu0 %321
        %323 = vset.pattern.permute.xlu0 0
        %324 = vperm.xlu0 %323, %v185
        %v325 = vpop.permute.xlu0 %324
        %326 = vset.pattern.permute.xlu0 0
        %327 = vperm.xlu0 %326, %v186
        %v328 = vpop.permute.xlu0 %327
        %329 = vset.pattern.permute.xlu0 0
        %330 = vperm.xlu0 %329, %v187
        %v331 = vpop.permute.xlu0 %330
        %332 = vset.pattern.permute.xlu0 0
        %333 = vperm.xlu0 %332, %v188
        %v334 = vpop.permute.xlu0 %333
        %335 = vset.pattern.permute.xlu0 0
        %336 = vperm.xlu0 %335, %v189
        %v337 = vpop.permute.xlu0 %336
        %338 = vset.pattern.permute.xlu0 0
        %339 = vperm.xlu0 %338, %v190
        %v340 = vpop.permute.xlu0 %339
        %341 = vset.pattern.permute.xlu0 0
        %342 = vperm.xlu0 %341, %v191
        %v343 = vpop.permute.xlu0 %342
        %344 = vset.pattern.permute.xlu0 0
        %345 = vperm.xlu0 %344, %v192
        %v346 = vpop.permute.xlu0 %345
        %347 = vset.pattern.permute.xlu0 0
        %348 = vperm.xlu0 %347, %v193
        %v349 = vpop.permute.xlu0 %348
        %350 = vset.pattern.permute.xlu0 0
        %351 = vperm.xlu0 %350, %v194
        %v352 = vpop.permute.xlu0 %351
        %353 = vset.pattern.permute.xlu0 0
        %354 = vperm.xlu0 %353, %v195
        %v355 = vpop.permute.xlu0 %354
        %356 = vset.pattern.permute.xlu0 0
        %357 = vperm.xlu0 %356, %v196
        %v358 = vpop.permute.xlu0 %357
        %359 = vset.pattern.permute.xlu0 0
        %360 = vperm.xlu0 %359, %v197
        %v361 = vpop.permute.xlu0 %360
        %362 = vset.pattern.permute.xlu0 0
        %363 = vperm.xlu0 %362, %v198
        %v364 = vpop.permute.xlu0 %363
        %365 = vset.pattern.permute.xlu0 0
        %366 = vperm.xlu0 %365, %v199
        %v367 = vpop.permute.xlu0 %366
        %368 = vset.pattern.permute.xlu0 0
        %369 = vperm.xlu0 %368, %v200
        %v370 = vpop.permute.xlu0 %369
        %371 = vset.pattern.permute.xlu0 0
        %372 = vperm.xlu0 %371, %v201
        %v373 = vpop.permute.xlu0 %372
        %374 = vset.pattern.permute.xlu0 0
        %375 = vperm.xlu0 %374, %v202
        %v376 = vpop.permute.xlu0 %375
        %377 = vset.pattern.permute.xlu0 0
        %378 = vperm.xlu0 %377, %v203
        %v379 = vpop.permute.xlu0 %378
        %380 = vset.pattern.permute.xlu0 0
        %381 = vperm.xlu0 %380, %v204
        %v382 = vpop.permute.xlu0 %381
        %383 = vset.pattern.permute.xlu0 0
        %384 = vperm.xlu0 %383, %v205
        %v385 = vpop.permute.xlu0 %384
        %386 = vset.pattern.permute.xlu0 0
        %387 = vperm.xlu0 %386, %v206
        %v388 = vpop.permute.xlu0 %387
        %389 = vset.pattern.permute.xlu0 0
        %390 = vperm.xlu0 %389, %v207
        %v391 = vpop.permute.xlu0 %390
        %392 = vset.pattern.permute.xlu0 0
        %393 = vperm.xlu0 %392, %v208
        %v394 = vpop.permute.xlu0 %393
        %395 = vset.pattern.permute.xlu0 0
        %396 = vperm.xlu0 %395, %v209
        %v397 = vpop.permute.xlu0 %396
        %398 = vset.pattern.permute.xlu0 0
        %399 = vperm.xlu0 %398, %v210
        %v400 = vpop.permute.xlu0 %399
        %401 = vset.pattern.permute.xlu0 0
        %402 = vperm.xlu0 %401, %v211
        %v403 = vpop.permute.xlu0 %402
        %404 = vset.pattern.permute.xlu0 0
        %405 = vperm.xlu0 %404, %v212
        %v406 = vpop.permute.xlu0 %405
        %vm407 = vcmp.eq.s32.totalorder %v214, %v217
        %vm408 = vcmp.eq.s32.totalorder %v214, %v220
        %vm409 = vcmp.eq.s32.totalorder %v214, %v223
        %vm410 = vcmp.eq.s32.totalorder %v214, %v226
        %vm411 = vcmp.eq.s32.totalorder %v214, %v229
        %vm412 = vcmp.eq.s32.totalorder %v214, %v232
        %vm413 = vcmp.eq.s32.totalorder %v214, %v235
        %vm414 = vcmp.eq.s32.totalorder %v214, %v238
        %vm415 = vcmp.eq.s32.totalorder %v214, %v241
        %vm416 = vcmp.eq.s32.totalorder %v214, %v244
        %vm417 = vcmp.eq.s32.totalorder %v214, %v247
        %vm418 = vcmp.eq.s32.totalorder %v214, %v250
        %vm419 = vcmp.eq.s32.totalorder %v214, %v253
        %vm420 = vcmp.eq.s32.totalorder %v214, %v256
        %vm421 = vcmp.eq.s32.totalorder %v214, %v259
        %vm422 = vcmp.eq.s32.totalorder %v214, %v262
        %vm423 = vcmp.eq.s32.totalorder %v214, %v265
        %vm424 = vcmp.eq.s32.totalorder %v214, %v268
        %vm425 = vcmp.eq.s32.totalorder %v214, %v271
        %vm426 = vcmp.eq.s32.totalorder %v214, %v274
        %vm427 = vcmp.eq.s32.totalorder %v214, %v277
        %vm428 = vcmp.eq.s32.totalorder %v214, %v280
        %vm429 = vcmp.eq.s32.totalorder %v214, %v283
        %vm430 = vcmp.eq.s32.totalorder %v214, %v286
        %vm431 = vcmp.eq.s32.totalorder %v214, %v289
        %vm432 = vcmp.eq.s32.totalorder %v214, %v292
        %vm433 = vcmp.eq.s32.totalorder %v214, %v295
        %vm434 = vcmp.eq.s32.totalorder %v214, %v298
        %vm435 = vcmp.eq.s32.totalorder %v214, %v301
        %vm436 = vcmp.eq.s32.totalorder %v214, %v304
        %vm437 = vcmp.eq.s32.totalorder %v214, %v307
        %vm438 = vcmp.eq.s32.totalorder %v214, %v310
        %vm439 = vcmp.eq.s32.totalorder %v214, %v313
        %vm440 = vcmp.eq.s32.totalorder %v214, %v316
        %vm441 = vcmp.eq.s32.totalorder %v214, %v319
        %vm442 = vcmp.eq.s32.totalorder %v214, %v322
        %vm443 = vcmp.eq.s32.totalorder %v214, %v325
        %vm444 = vcmp.eq.s32.totalorder %v214, %v328
        %vm445 = vcmp.eq.s32.totalorder %v214, %v331
        %vm446 = vcmp.eq.s32.totalorder %v214, %v334
        %vm447 = vcmp.eq.s32.totalorder %v214, %v337
        %vm448 = vcmp.eq.s32.totalorder %v214, %v340
        %vm449 = vcmp.eq.s32.totalorder %v214, %v343
        %vm450 = vcmp.eq.s32.totalorder %v214, %v346
        %vm451 = vcmp.eq.s32.totalorder %v214, %v349
        %vm452 = vcmp.eq.s32.totalorder %v214, %v352
        %vm453 = vcmp.eq.s32.totalorder %v214, %v355
        %vm454 = vcmp.eq.s32.totalorder %v214, %v358
        %vm455 = vcmp.eq.s32.totalorder %v214, %v361
        %vm456 = vcmp.eq.s32.totalorder %v214, %v364
        %vm457 = vcmp.eq.s32.totalorder %v214, %v367
        %vm458 = vcmp.eq.s32.totalorder %v214, %v370
        %vm459 = vcmp.eq.s32.totalorder %v214, %v373
        %vm460 = vcmp.eq.s32.totalorder %v214, %v376
        %vm461 = vcmp.eq.s32.totalorder %v214, %v379
        %vm462 = vcmp.eq.s32.totalorder %v214, %v382
        %vm463 = vcmp.eq.s32.totalorder %v214, %v385
        %vm464 = vcmp.eq.s32.totalorder %v214, %v388
        %vm465 = vcmp.eq.s32.totalorder %v214, %v391
        %vm466 = vcmp.eq.s32.totalorder %v214, %v394
        %vm467 = vcmp.eq.s32.totalorder %v214, %v397
        %vm468 = vcmp.eq.s32.totalorder %v214, %v400
        %vm469 = vcmp.eq.s32.totalorder %v214, %v403
        %vm470 = vcmp.eq.s32.totalorder %v214, %v406
        %v471 = vsel %vm407, 1, 0
        %v472 = vsel %vm408, 1, 0
        %v473 = vsel %vm409, 1, 0
        %v474 = vsel %vm410, 1, 0
        %v475 = vsel %vm411, 1, 0
        %v476 = vsel %vm412, 1, 0
        %v477 = vsel %vm413, 1, 0
        %v478 = vsel %vm414, 1, 0
        %v479 = vsel %vm415, 1, 0
        %v480 = vsel %vm416, 1, 0
        %v481 = vsel %vm417, 1, 0
        %v482 = vsel %vm418, 1, 0
        %v483 = vsel %vm419, 1, 0
        %v484 = vsel %vm420, 1, 0
        %v485 = vsel %vm421, 1, 0
        %v486 = vsel %vm422, 1, 0
        %v487 = vsel %vm423, 1, 0
        %v488 = vsel %vm424, 1, 0
        %v489 = vsel %vm425, 1, 0
        %v490 = vsel %vm426, 1, 0
        %v491 = vsel %vm427, 1, 0
        %v492 = vsel %vm428, 1, 0
        %v493 = vsel %vm429, 1, 0
        %v494 = vsel %vm430, 1, 0
        %v495 = vsel %vm431, 1, 0
        %v496 = vsel %vm432, 1, 0
        %v497 = vsel %vm433, 1, 0
        %v498 = vsel %vm434, 1, 0
        %v499 = vsel %vm435, 1, 0
        %v500 = vsel %vm436, 1, 0
        %v501 = vsel %vm437, 1, 0
        %v502 = vsel %vm438, 1, 0
        %v503 = vsel %vm439, 1, 0
        %v504 = vsel %vm440, 1, 0
        %v505 = vsel %vm441, 1, 0
        %v506 = vsel %vm442, 1, 0
        %v507 = vsel %vm443, 1, 0
        %v508 = vsel %vm444, 1, 0
        %v509 = vsel %vm445, 1, 0
        %v510 = vsel %vm446, 1, 0
        %v511 = vsel %vm447, 1, 0
        %v512 = vsel %vm448, 1, 0
        %v513 = vsel %vm449, 1, 0
        %v514 = vsel %vm450, 1, 0
        %v515 = vsel %vm451, 1, 0
        %v516 = vsel %vm452, 1, 0
        %v517 = vsel %vm453, 1, 0
        %v518 = vsel %vm454, 1, 0
        %v519 = vsel %vm455, 1, 0
        %v520 = vsel %vm456, 1, 0
        %v521 = vsel %vm457, 1, 0
        %v522 = vsel %vm458, 1, 0
        %v523 = vsel %vm459, 1, 0
        %v524 = vsel %vm460, 1, 0
        %v525 = vsel %vm461, 1, 0
        %v526 = vsel %vm462, 1, 0
        %v527 = vsel %vm463, 1, 0
        %v528 = vsel %vm464, 1, 0
        %v529 = vsel %vm465, 1, 0
        %v530 = vsel %vm466, 1, 0
        %v531 = vsel %vm467, 1, 0
        %v532 = vsel %vm468, 1, 0
        %v533 = vsel %vm469, 1, 0
        %v534 = vsel %vm470, 1, 0
        %v535 = vcvt.s32.f32 %v471
        %v536 = vcvt.s32.f32 %v472
        %v537 = vcvt.s32.f32 %v473
        %v538 = vcvt.s32.f32 %v474
        %v539 = vcvt.s32.f32 %v475
        %v540 = vcvt.s32.f32 %v476
        %v541 = vcvt.s32.f32 %v477
        %v542 = vcvt.s32.f32 %v478
        %v543 = vcvt.s32.f32 %v479
        %v544 = vcvt.s32.f32 %v480
        %v545 = vcvt.s32.f32 %v481
        %v546 = vcvt.s32.f32 %v482
        %v547 = vcvt.s32.f32 %v483
        %v548 = vcvt.s32.f32 %v484
        %v549 = vcvt.s32.f32 %v485
        %v550 = vcvt.s32.f32 %v486
        %v551 = vcvt.s32.f32 %v487
        %v552 = vcvt.s32.f32 %v488
        %v553 = vcvt.s32.f32 %v489
        %v554 = vcvt.s32.f32 %v490
        %v555 = vcvt.s32.f32 %v491
        %v556 = vcvt.s32.f32 %v492
        %v557 = vcvt.s32.f32 %v493
        %v558 = vcvt.s32.f32 %v494
        %v559 = vcvt.s32.f32 %v495
        %v560 = vcvt.s32.f32 %v496
        %v561 = vcvt.s32.f32 %v497
        %v562 = vcvt.s32.f32 %v498
        %v563 = vcvt.s32.f32 %v499
        %v564 = vcvt.s32.f32 %v500
        %v565 = vcvt.s32.f32 %v501
        %v566 = vcvt.s32.f32 %v502
        %v567 = vcvt.s32.f32 %v503
        %v568 = vcvt.s32.f32 %v504
        %v569 = vcvt.s32.f32 %v505
        %v570 = vcvt.s32.f32 %v506
        %v571 = vcvt.s32.f32 %v507
        %v572 = vcvt.s32.f32 %v508
        %v573 = vcvt.s32.f32 %v509
        %v574 = vcvt.s32.f32 %v510
        %v575 = vcvt.s32.f32 %v511
        %v576 = vcvt.s32.f32 %v512
        %v577 = vcvt.s32.f32 %v513
        %v578 = vcvt.s32.f32 %v514
        %v579 = vcvt.s32.f32 %v515
        %v580 = vcvt.s32.f32 %v516
        %v581 = vcvt.s32.f32 %v517
        %v582 = vcvt.s32.f32 %v518
        %v583 = vcvt.s32.f32 %v519
        %v584 = vcvt.s32.f32 %v520
        %v585 = vcvt.s32.f32 %v521
        %v586 = vcvt.s32.f32 %v522
        %v587 = vcvt.s32.f32 %v523
        %v588 = vcvt.s32.f32 %v524
        %v589 = vcvt.s32.f32 %v525
        %v590 = vcvt.s32.f32 %v526
        %v591 = vcvt.s32.f32 %v527
        %v592 = vcvt.s32.f32 %v528
        %v593 = vcvt.s32.f32 %v529
        %v594 = vcvt.s32.f32 %v530
        %v595 = vcvt.s32.f32 %v531
        %v596 = vcvt.s32.f32 %v532
        %v597 = vcvt.s32.f32 %v533
        %v598 = vcvt.s32.f32 %v534
        %v599 = vld [vmem:[%s1] sm:$0xff]
        %v600 = vld [vmem:[%s1 + $0x8] sm:$0xff]
        %v601 = vld [vmem:[%s1 + $0x10] sm:$0xff]
        %v602 = vld [vmem:[%s1 + $0x18] sm:$0xff]
        %v603 = vld [vmem:[%s1 + $0x20] sm:$0xff]
        %v604 = vld [vmem:[%s1 + $0x28] sm:$0xff]
        %v605 = vld [vmem:[%s1 + $0x30] sm:$0xff]
        %v606 = vld [vmem:[%s1 + $0x38] sm:$0xff]
        %v607 = vld [vmem:[%s1 + $0x40] sm:$0xff]
        %v608 = vld [vmem:[%s1 + $0x48] sm:$0xff]
        %v609 = vld [vmem:[%s1 + $0x50] sm:$0xff]
        %v610 = vld [vmem:[%s1 + $0x58] sm:$0xff]
        %v611 = vld [vmem:[%s1 + $0x60] sm:$0xff]
        %v612 = vld [vmem:[%s1 + $0x68] sm:$0xff]
        %v613 = vld [vmem:[%s1 + $0x70] sm:$0xff]
        %v614 = vld [vmem:[%s1 + $0x78] sm:$0xff]
        %615 = vmatprep.subr.mxu0 0.0
        %616 = vmatpush1.msra.mxu0 %v599
        %617 = vmatprep.subr.mxu0 0.0
        %618 = vmatpush1.msra.mxu0 %v600
        %619 = vmatprep.subr.mxu0 0.0
        %620 = vmatpush1.msra.mxu0 %v601
        %621 = vmatprep.subr.mxu0 0.0
        %622 = vmatpush1.msra.mxu0 %v602
        %623 = vmatprep.subr.mxu0 0.0
        %624 = vmatpush1.msra.mxu0 %v603
        %625 = vmatprep.subr.mxu0 0.0
        %626 = vmatpush1.msra.mxu0 %v604
        %627 = vmatprep.subr.mxu0 0.0
        %628 = vmatpush1.msra.mxu0 %v605
        %629 = vmatprep.subr.mxu0 0.0
        %630 = vmatpush1.msra.mxu0 %v606
        %631 = vmatprep.subr.mxu0 0.0
        %632 = vmatpush1.msra.mxu0 %v607
        %633 = vmatprep.subr.mxu0 0.0
        %634 = vmatpush1.msra.mxu0 %v608
        %635 = vmatprep.subr.mxu0 0.0
        %636 = vmatpush1.msra.mxu0 %v609
        %637 = vmatprep.subr.mxu0 0.0
        %638 = vmatpush1.msra.mxu0 %v610
        %639 = vmatprep.subr.mxu0 0.0
        %640 = vmatpush1.msra.mxu0 %v611
        %641 = vmatprep.subr.mxu0 0.0
        %642 = vmatpush1.msra.mxu0 %v612
        %643 = vmatprep.subr.mxu0 0.0
        %644 = vmatpush1.msra.mxu0 %v613
        %645 = vmatprep.subr.mxu0 0.0
        %646 = vmatpush1.msra.mxu0 %v614
        %647 = vmatprep.subr.mxu0 0.0
        %648 = vmatpush1.msra.mxu0 0.0
        %649 = vmatprep.subr.mxu0 0.0
        %650 = vmatpush1.msra.mxu0 0.0
        %651 = vmatprep.subr.mxu0 0.0
        %652 = vmatpush1.msra.mxu0 0.0
        %653 = vmatprep.subr.mxu0 0.0
        %654 = vmatpush1.msra.mxu0 0.0
        %655 = vmatprep.subr.mxu0 0.0
        %656 = vmatpush1.msra.mxu0 0.0
        %657 = vmatprep.subr.mxu0 0.0
        %658 = vmatpush1.msra.mxu0 0.0
        %659 = vmatprep.subr.mxu0 0.0
        %660 = vmatpush1.msra.mxu0 0.0
        %661 = vmatprep.subr.mxu0 0.0
        %662 = vmatpush1.msra.mxu0 0.0
        %663 = vmatprep.subr.mxu0 0.0
        %664 = vmatpush1.msra.mxu0 0.0
        %665 = vmatprep.subr.mxu0 0.0
        %666 = vmatpush1.msra.mxu0 0.0
        %667 = vmatprep.subr.mxu0 0.0
        %668 = vmatpush1.msra.mxu0 0.0
        %669 = vmatprep.subr.mxu0 0.0
        %670 = vmatpush1.msra.mxu0 0.0
        %671 = vmatprep.subr.mxu0 0.0
        %672 = vmatpush1.msra.mxu0 0.0
        %673 = vmatprep.subr.mxu0 0.0
        %674 = vmatpush1.msra.mxu0 0.0
        %675 = vmatprep.subr.mxu0 0.0
        %676 = vmatpush1.msra.mxu0 0.0
        %677 = vmatprep.subr.mxu0 0.0
        %678 = vmatpush1.msra.mxu0 0.0
        %679 = vmatprep.mubr.f32.mxu0 0.0
        %680 = vmatmul.mubr.f32.gmra.mrb[0].mxu0 %v535
        %v681 = vpop.f32.mrb[0].mxu0
        %v682 = vadd.f32 0.0, %v681
        %v683 = vpop.f32.mrb[0].mxu0
        %684 = vmatprep.mubr.f32.mxu0 0.0
        %685 = vmatmul.mubr.f32.gmra.mrb[0].mxu0 %v536
        %v686 = vpop.f32.mrb[0].mxu0
        %v687 = vadd.f32 0.0, %v686
        %v688 = vpop.f32.mrb[0].mxu0
        %689 = vmatprep.mubr.f32.mxu0 0.0
        %690 = vmatmul.mubr.f32.gmra.mrb[0].mxu0 %v537
        %v691 = vpop.f32.mrb[0].mxu0
        %v692 = vadd.f32 0.0, %v691
        %v693 = vpop.f32.mrb[0].mxu0
        %694 = vmatprep.mubr.f32.mxu0 0.0
        %695 = vmatmul.mubr.f32.gmra.mrb[0].mxu0 %v538
        %v696 = vpop.f32.mrb[0].mxu0
        %v697 = vadd.f32 0.0, %v696
        %v698 = vpop.f32.mrb[0].mxu0
        %699 = vmatprep.mubr.f32.mxu0 0.0
        %700 = vmatmul.mubr.f32.gmra.mrb[0].mxu0 %v539
        %v701 = vpop.f32.mrb[0].mxu0
        %v702 = vadd.f32 0.0, %v701
        %v703 = vpop.f32.mrb[0].mxu0
        %704 = vmatprep.mubr.f32.mxu0 0.0
        %705 = vmatmul.mubr.f32.gmra.mrb[0].mxu0 %v540
        %v706 = vpop.f32.mrb[0].mxu0
        %v707 = vadd.f32 0.0, %v706
        %v708 = vpop.f32.mrb[0].mxu0
        %709 = vmatprep.mubr.f32.mxu0 0.0
        %710 = vmatmul.mubr.f32.gmra.mrb[0].mxu0 %v541
        %v711 = vpop.f32.mrb[0].mxu0
        %v712 = vadd.f32 0.0, %v711
        %v713 = vpop.f32.mrb[0].mxu0
        %714 = vmatprep.mubr.f32.mxu0 0.0
        %715 = vmatmul.mubr.f32.gmra.mrb[0].mxu0 %v542
        %v716 = vpop.f32.mrb[0].mxu0
        %v717 = vadd.f32 0.0, %v716
        %v718 = vpop.f32.mrb[0].mxu0
        %719 = vmatprep.mubr.f32.mxu0 0.0
        %720 = vmatmul.mubr.f32.gmra.mrb[0].mxu0 %v543
        %v721 = vpop.f32.mrb[0].mxu0
        %v722 = vadd.f32 0.0, %v721
        %v723 = vpop.f32.mrb[0].mxu0
        %724 = vmatprep.mubr.f32.mxu0 0.0
        %725 = vmatmul.mubr.f32.gmra.mrb[0].mxu0 %v544
        %v726 = vpop.f32.mrb[0].mxu0
        %v727 = vadd.f32 0.0, %v726
        %v728 = vpop.f32.mrb[0].mxu0
        %729 = vmatprep.mubr.f32.mxu0 0.0
        %730 = vmatmul.mubr.f32.gmra.mrb[0].mxu0 %v545
        %v731 = vpop.f32.mrb[0].mxu0
        %v732 = vadd.f32 0.0, %v731
        %v733 = vpop.f32.mrb[0].mxu0
        %734 = vmatprep.mubr.f32.mxu0 0.0
        %735 = vmatmul.mubr.f32.gmra.mrb[0].mxu0 %v546
        %v736 = vpop.f32.mrb[0].mxu0
        %v737 = vadd.f32 0.0, %v736
        %v738 = vpop.f32.mrb[0].mxu0
        %739 = vmatprep.mubr.f32.mxu0 0.0
        %740 = vmatmul.mubr.f32.gmra.mrb[0].mxu0 %v547
        %v741 = vpop.f32.mrb[0].mxu0
        %v742 = vadd.f32 0.0, %v741
        %v743 = vpop.f32.mrb[0].mxu0
        %744 = vmatprep.mubr.f32.mxu0 0.0
        %745 = vmatmul.mubr.f32.gmra.mrb[0].mxu0 %v548
        %v746 = vpop.f32.mrb[0].mxu0
        %v747 = vadd.f32 0.0, %v746
        %v748 = vpop.f32.mrb[0].mxu0
        %749 = vmatprep.mubr.f32.mxu0 0.0
        %750 = vmatmul.mubr.f32.gmra.mrb[0].mxu0 %v549
        %v751 = vpop.f32.mrb[0].mxu0
        %v752 = vadd.f32 0.0, %v751
        %v753 = vpop.f32.mrb[0].mxu0
        %754 = vmatprep.mubr.f32.mxu0 0.0
        %755 = vmatmul.mubr.f32.gmra.mrb[0].mxu0 %v550
        %v756 = vpop.f32.mrb[0].mxu0
        %v757 = vadd.f32 0.0, %v756
        %v758 = vpop.f32.mrb[0].mxu0
        %759 = vmatprep.mubr.f32.mxu0 0.0
        %760 = vmatmul.mubr.f32.gmra.mrb[0].mxu0 %v551
        %v761 = vpop.f32.mrb[0].mxu0
        %v762 = vadd.f32 0.0, %v761
        %v763 = vpop.f32.mrb[0].mxu0
        %764 = vmatprep.mubr.f32.mxu0 0.0
        %765 = vmatmul.mubr.f32.gmra.mrb[0].mxu0 %v552
        %v766 = vpop.f32.mrb[0].mxu0
        %v767 = vadd.f32 0.0, %v766
        %v768 = vpop.f32.mrb[0].mxu0
        %769 = vmatprep.mubr.f32.mxu0 0.0
        %770 = vmatmul.mubr.f32.gmra.mrb[0].mxu0 %v553
        %v771 = vpop.f32.mrb[0].mxu0
        %v772 = vadd.f32 0.0, %v771
        %v773 = vpop.f32.mrb[0].mxu0
        %774 = vmatprep.mubr.f32.mxu0 0.0
        %775 = vmatmul.mubr.f32.gmra.mrb[0].mxu0 %v554
        %v776 = vpop.f32.mrb[0].mxu0
        %v777 = vadd.f32 0.0, %v776
        %v778 = vpop.f32.mrb[0].mxu0
        %779 = vmatprep.mubr.f32.mxu0 0.0
        %780 = vmatmul.mubr.f32.gmra.mrb[0].mxu0 %v555
        %v781 = vpop.f32.mrb[0].mxu0
        %v782 = vadd.f32 0.0, %v781
        %v783 = vpop.f32.mrb[0].mxu0
        %784 = vmatprep.mubr.f32.mxu0 0.0
        %785 = vmatmul.mubr.f32.gmra.mrb[0].mxu0 %v556
        %v786 = vpop.f32.mrb[0].mxu0
        %v787 = vadd.f32 0.0, %v786
        %v788 = vpop.f32.mrb[0].mxu0
        %789 = vmatprep.mubr.f32.mxu0 0.0
        %790 = vmatmul.mubr.f32.gmra.mrb[0].mxu0 %v557
        %v791 = vpop.f32.mrb[0].mxu0
        %v792 = vadd.f32 0.0, %v791
        %v793 = vpop.f32.mrb[0].mxu0
        %794 = vmatprep.mubr.f32.mxu0 0.0
        %795 = vmatmul.mubr.f32.gmra.mrb[0].mxu0 %v558
        %v796 = vpop.f32.mrb[0].mxu0
        %v797 = vadd.f32 0.0, %v796
        %v798 = vpop.f32.mrb[0].mxu0
        %799 = vmatprep.mubr.f32.mxu0 0.0
        %800 = vmatmul.mubr.f32.gmra.mrb[0].mxu0 %v559
        %v801 = vpop.f32.mrb[0].mxu0
        %v802 = vadd.f32 0.0, %v801
        %v803 = vpop.f32.mrb[0].mxu0
        %804 = vmatprep.mubr.f32.mxu0 0.0
        %805 = vmatmul.mubr.f32.gmra.mrb[0].mxu0 %v560
        %v806 = vpop.f32.mrb[0].mxu0
        %v807 = vadd.f32 0.0, %v806
        %v808 = vpop.f32.mrb[0].mxu0
        %809 = vmatprep.mubr.f32.mxu0 0.0
        %810 = vmatmul.mubr.f32.gmra.mrb[0].mxu0 %v561
        %v811 = vpop.f32.mrb[0].mxu0
        %v812 = vadd.f32 0.0, %v811
        %v813 = vpop.f32.mrb[0].mxu0
        %814 = vmatprep.mubr.f32.mxu0 0.0
        %815 = vmatmul.mubr.f32.gmra.mrb[0].mxu0 %v562
        %v816 = vpop.f32.mrb[0].mxu0
        %v817 = vadd.f32 0.0, %v816
        %v818 = vpop.f32.mrb[0].mxu0
        %819 = vmatprep.mubr.f32.mxu0 0.0
        %820 = vmatmul.mubr.f32.gmra.mrb[0].mxu0 %v563
        %v821 = vpop.f32.mrb[0].mxu0
        %v822 = vadd.f32 0.0, %v821
        %v823 = vpop.f32.mrb[0].mxu0
        %824 = vmatprep.mubr.f32.mxu0 0.0
        %825 = vmatmul.mubr.f32.gmra.mrb[0].mxu0 %v564
        %v826 = vpop.f32.mrb[0].mxu0
        %v827 = vadd.f32 0.0, %v826
        %v828 = vpop.f32.mrb[0].mxu0
        %829 = vmatprep.mubr.f32.mxu0 0.0
        %830 = vmatmul.mubr.f32.gmra.mrb[0].mxu0 %v565
        %v831 = vpop.f32.mrb[0].mxu0
        %v832 = vadd.f32 0.0, %v831
        %v833 = vpop.f32.mrb[0].mxu0
        %834 = vmatprep.mubr.f32.mxu0 0.0
        %835 = vmatmul.mubr.f32.gmra.mrb[0].mxu0 %v566
        %v836 = vpop.f32.mrb[0].mxu0
        %v837 = vadd.f32 0.0, %v836
        %v838 = vpop.f32.mrb[0].mxu0
        %839 = vmatprep.mubr.f32.mxu0 0.0
        %840 = vmatmul.mubr.f32.gmra.mrb[0].mxu0 %v567
        %v841 = vpop.f32.mrb[0].mxu0
        %v842 = vadd.f32 0.0, %v841
        %v843 = vpop.f32.mrb[0].mxu0
        %844 = vmatprep.mubr.f32.mxu0 0.0
        %845 = vmatmul.mubr.f32.gmra.mrb[0].mxu0 %v568
        %v846 = vpop.f32.mrb[0].mxu0
        %v847 = vadd.f32 0.0, %v846
        %v848 = vpop.f32.mrb[0].mxu0
        %849 = vmatprep.mubr.f32.mxu0 0.0
        %850 = vmatmul.mubr.f32.gmra.mrb[0].mxu0 %v569
        %v851 = vpop.f32.mrb[0].mxu0
        %v852 = vadd.f32 0.0, %v851
        %v853 = vpop.f32.mrb[0].mxu0
        %854 = vmatprep.mubr.f32.mxu0 0.0
        %855 = vmatmul.mubr.f32.gmra.mrb[0].mxu0 %v570
        %v856 = vpop.f32.mrb[0].mxu0
        %v857 = vadd.f32 0.0, %v856
        %v858 = vpop.f32.mrb[0].mxu0
        %859 = vmatprep.mubr.f32.mxu0 0.0
        %860 = vmatmul.mubr.f32.gmra.mrb[0].mxu0 %v571
        %v861 = vpop.f32.mrb[0].mxu0
        %v862 = vadd.f32 0.0, %v861
        %v863 = vpop.f32.mrb[0].mxu0
        %864 = vmatprep.mubr.f32.mxu0 0.0
        %865 = vmatmul.mubr.f32.gmra.mrb[0].mxu0 %v572
        %v866 = vpop.f32.mrb[0].mxu0
        %v867 = vadd.f32 0.0, %v866
        %v868 = vpop.f32.mrb[0].mxu0
        %869 = vmatprep.mubr.f32.mxu0 0.0
        %870 = vmatmul.mubr.f32.gmra.mrb[0].mxu0 %v573
        %v871 = vpop.f32.mrb[0].mxu0
        %v872 = vadd.f32 0.0, %v871
        %v873 = vpop.f32.mrb[0].mxu0
        %874 = vmatprep.mubr.f32.mxu0 0.0
        %875 = vmatmul.mubr.f32.gmra.mrb[0].mxu0 %v574
        %v876 = vpop.f32.mrb[0].mxu0
        %v877 = vadd.f32 0.0, %v876
        %v878 = vpop.f32.mrb[0].mxu0
        %879 = vmatprep.mubr.f32.mxu0 0.0
        %880 = vmatmul.mubr.f32.gmra.mrb[0].mxu0 %v575
        %v881 = vpop.f32.mrb[0].mxu0
        %v882 = vadd.f32 0.0, %v881
        %v883 = vpop.f32.mrb[0].mxu0
        %884 = vmatprep.mubr.f32.mxu0 0.0
        %885 = vmatmul.mubr.f32.gmra.mrb[0].mxu0 %v576
        %v886 = vpop.f32.mrb[0].mxu0
        %v887 = vadd.f32 0.0, %v886
        %v888 = vpop.f32.mrb[0].mxu0
        %889 = vmatprep.mubr.f32.mxu0 0.0
        %890 = vmatmul.mubr.f32.gmra.mrb[0].mxu0 %v577
        %v891 = vpop.f32.mrb[0].mxu0
        %v892 = vadd.f32 0.0, %v891
        %v893 = vpop.f32.mrb[0].mxu0
        %894 = vmatprep.mubr.f32.mxu0 0.0
        %895 = vmatmul.mubr.f32.gmra.mrb[0].mxu0 %v578
        %v896 = vpop.f32.mrb[0].mxu0
        %v897 = vadd.f32 0.0, %v896
        %v898 = vpop.f32.mrb[0].mxu0
        %899 = vmatprep.mubr.f32.mxu0 0.0
        %900 = vmatmul.mubr.f32.gmra.mrb[0].mxu0 %v579
        %v901 = vpop.f32.mrb[0].mxu0
        %v902 = vadd.f32 0.0, %v901
        %v903 = vpop.f32.mrb[0].mxu0
        %904 = vmatprep.mubr.f32.mxu0 0.0
        %905 = vmatmul.mubr.f32.gmra.mrb[0].mxu0 %v580
        %v906 = vpop.f32.mrb[0].mxu0
        %v907 = vadd.f32 0.0, %v906
        %v908 = vpop.f32.mrb[0].mxu0
        %909 = vmatprep.mubr.f32.mxu0 0.0
        %910 = vmatmul.mubr.f32.gmra.mrb[0].mxu0 %v581
        %v911 = vpop.f32.mrb[0].mxu0
        %v912 = vadd.f32 0.0, %v911
        %v913 = vpop.f32.mrb[0].mxu0
        %914 = vmatprep.mubr.f32.mxu0 0.0
        %915 = vmatmul.mubr.f32.gmra.mrb[0].mxu0 %v582
        %v916 = vpop.f32.mrb[0].mxu0
        %v917 = vadd.f32 0.0, %v916
        %v918 = vpop.f32.mrb[0].mxu0
        %919 = vmatprep.mubr.f32.mxu0 0.0
        %920 = vmatmul.mubr.f32.gmra.mrb[0].mxu0 %v583
        %v921 = vpop.f32.mrb[0].mxu0
        %v922 = vadd.f32 0.0, %v921
        %v923 = vpop.f32.mrb[0].mxu0
        %924 = vmatprep.mubr.f32.mxu0 0.0
        %925 = vmatmul.mubr.f32.gmra.mrb[0].mxu0 %v584
        %v926 = vpop.f32.mrb[0].mxu0
        %v927 = vadd.f32 0.0, %v926
        %v928 = vpop.f32.mrb[0].mxu0
        %929 = vmatprep.mubr.f32.mxu0 0.0
        %930 = vmatmul.mubr.f32.gmra.mrb[0].mxu0 %v585
        %v931 = vpop.f32.mrb[0].mxu0
        %v932 = vadd.f32 0.0, %v931
        %v933 = vpop.f32.mrb[0].mxu0
        %934 = vmatprep.mubr.f32.mxu0 0.0
        %935 = vmatmul.mubr.f32.gmra.mrb[0].mxu0 %v586
        %v936 = vpop.f32.mrb[0].mxu0
        %v937 = vadd.f32 0.0, %v936
        %v938 = vpop.f32.mrb[0].mxu0
        %939 = vmatprep.mubr.f32.mxu0 0.0
        %940 = vmatmul.mubr.f32.gmra.mrb[0].mxu0 %v587
        %v941 = vpop.f32.mrb[0].mxu0
        %v942 = vadd.f32 0.0, %v941
        %v943 = vpop.f32.mrb[0].mxu0
        %944 = vmatprep.mubr.f32.mxu0 0.0
        %945 = vmatmul.mubr.f32.gmra.mrb[0].mxu0 %v588
        %v946 = vpop.f32.mrb[0].mxu0
        %v947 = vadd.f32 0.0, %v946
        %v948 = vpop.f32.mrb[0].mxu0
        %949 = vmatprep.mubr.f32.mxu0 0.0
        %950 = vmatmul.mubr.f32.gmra.mrb[0].mxu0 %v589
        %v951 = vpop.f32.mrb[0].mxu0
        %v952 = vadd.f32 0.0, %v951
        %v953 = vpop.f32.mrb[0].mxu0
        %954 = vmatprep.mubr.f32.mxu0 0.0
        %955 = vmatmul.mubr.f32.gmra.mrb[0].mxu0 %v590
        %v956 = vpop.f32.mrb[0].mxu0
        %v957 = vadd.f32 0.0, %v956
        %v958 = vpop.f32.mrb[0].mxu0
        %959 = vmatprep.mubr.f32.mxu0 0.0
        %960 = vmatmul.mubr.f32.gmra.mrb[0].mxu0 %v591
        %v961 = vpop.f32.mrb[0].mxu0
        %v962 = vadd.f32 0.0, %v961
        %v963 = vpop.f32.mrb[0].mxu0
        %964 = vmatprep.mubr.f32.mxu0 0.0
        %965 = vmatmul.mubr.f32.gmra.mrb[0].mxu0 %v592
        %v966 = vpop.f32.mrb[0].mxu0
        %v967 = vadd.f32 0.0, %v966
        %v968 = vpop.f32.mrb[0].mxu0
        %969 = vmatprep.mubr.f32.mxu0 0.0
        %970 = vmatmul.mubr.f32.gmra.mrb[0].mxu0 %v593
        %v971 = vpop.f32.mrb[0].mxu0
        %v972 = vadd.f32 0.0, %v971
        %v973 = vpop.f32.mrb[0].mxu0
        %974 = vmatprep.mubr.f32.mxu0 0.0
        %975 = vmatmul.mubr.f32.gmra.mrb[0].mxu0 %v594
        %v976 = vpop.f32.mrb[0].mxu0
        %v977 = vadd.f32 0.0, %v976
        %v978 = vpop.f32.mrb[0].mxu0
        %979 = vmatprep.mubr.f32.mxu0 0.0
        %980 = vmatmul.mubr.f32.gmra.mrb[0].mxu0 %v595
        %v981 = vpop.f32.mrb[0].mxu0
        %v982 = vadd.f32 0.0, %v981
        %v983 = vpop.f32.mrb[0].mxu0
        %984 = vmatprep.mubr.f32.mxu0 0.0
        %985 = vmatmul.mubr.f32.gmra.mrb[0].mxu0 %v596
        %v986 = vpop.f32.mrb[0].mxu0
        %v987 = vadd.f32 0.0, %v986
        %v988 = vpop.f32.mrb[0].mxu0
        %989 = vmatprep.mubr.f32.mxu0 0.0
        %990 = vmatmul.mubr.f32.gmra.mrb[0].mxu0 %v597
        %v991 = vpop.f32.mrb[0].mxu0
        %v992 = vadd.f32 0.0, %v991
        %v993 = vpop.f32.mrb[0].mxu0
        %994 = vmatprep.mubr.f32.mxu0 0.0
        %995 = vmatmul.mubr.f32.gmra.mrb[0].mxu0 %v598
        %v996 = vpop.f32.mrb[0].mxu0
        %v997 = vadd.f32 0.0, %v996
        %v998 = vpop.f32.mrb[0].mxu0
        %999 = vdwg.mxu0
        %1000 = vst [vmem:[%s137] sm:$0xff] %v682
        %1001 = vst [vmem:[%s137 + $0x8] sm:$0xff] %v687
        %1002 = vst [vmem:[%s137 + $0x10] sm:$0xff] %v692
        %1003 = vst [vmem:[%s137 + $0x18] sm:$0xff] %v697
        %1004 = vst [vmem:[%s137 + $0x20] sm:$0xff] %v702
        %1005 = vst [vmem:[%s137 + $0x28] sm:$0xff] %v707
        %1006 = vst [vmem:[%s137 + $0x30] sm:$0xff] %v712
        %1007 = vst [vmem:[%s137 + $0x38] sm:$0xff] %v717
        %1008 = vst [vmem:[%s137 + $0x40] sm:$0xff] %v722
        %1009 = vst [vmem:[%s137 + $0x48] sm:$0xff] %v727
        %1010 = vst [vmem:[%s137 + $0x50] sm:$0xff] %v732
        %1011 = vst [vmem:[%s137 + $0x58] sm:$0xff] %v737
        %1012 = vst [vmem:[%s137 + $0x60] sm:$0xff] %v742
        %1013 = vst [vmem:[%s137 + $0x68] sm:$0xff] %v747
        %1014 = vst [vmem:[%s137 + $0x70] sm:$0xff] %v752
        %1015 = vst [vmem:[%s137 + $0x78] sm:$0xff] %v757
        %1016 = vst [vmem:[%s137 + $0x80] sm:$0xff] %v762
        %1017 = vst [vmem:[%s137 + $0x88] sm:$0xff] %v767
        %1018 = vst [vmem:[%s137 + $0x90] sm:$0xff] %v772
        %1019 = vst [vmem:[%s137 + $0x98] sm:$0xff] %v777
        %1020 = vst [vmem:[%s137 + $0xa0] sm:$0xff] %v782
        %1021 = vst [vmem:[%s137 + $0xa8] sm:$0xff] %v787
        %1022 = vst [vmem:[%s137 + $0xb0] sm:$0xff] %v792
        %1023 = vst [vmem:[%s137 + $0xb8] sm:$0xff] %v797
        %1024 = vst [vmem:[%s137 + $0xc0] sm:$0xff] %v802
        %1025 = vst [vmem:[%s137 + $0xc8] sm:$0xff] %v807
        %1026 = vst [vmem:[%s137 + $0xd0] sm:$0xff] %v812
        %1027 = vst [vmem:[%s137 + $0xd8] sm:$0xff] %v817
        %1028 = vst [vmem:[%s137 + $0xe0] sm:$0xff] %v822
        %1029 = vst [vmem:[%s137 + $0xe8] sm:$0xff] %v827
        %1030 = vst [vmem:[%s137 + $0xf0] sm:$0xff] %v832
        %1031 = vst [vmem:[%s137 + $0xf8] sm:$0xff] %v837
        %1032 = vst [vmem:[%s137 + $0x100] sm:$0xff] %v842
        %1033 = vst [vmem:[%s137 + $0x108] sm:$0xff] %v847
        %1034 = vst [vmem:[%s137 + $0x110] sm:$0xff] %v852
        %1035 = vst [vmem:[%s137 + $0x118] sm:$0xff] %v857
        %1036 = vst [vmem:[%s137 + $0x120] sm:$0xff] %v862
        %1037 = vst [vmem:[%s137 + $0x128] sm:$0xff] %v867
        %1038 = vst [vmem:[%s137 + $0x130] sm:$0xff] %v872
        %1039 = vst [vmem:[%s137 + $0x138] sm:$0xff] %v877
        %1040 = vst [vmem:[%s137 + $0x140] sm:$0xff] %v882
        %1041 = vst [vmem:[%s137 + $0x148] sm:$0xff] %v887
        %1042 = vst [vmem:[%s137 + $0x150] sm:$0xff] %v892
        %1043 = vst [vmem:[%s137 + $0x158] sm:$0xff] %v897
        %1044 = vst [vmem:[%s137 + $0x160] sm:$0xff] %v902
        %1045 = vst [vmem:[%s137 + $0x168] sm:$0xff] %v907
        %1046 = vst [vmem:[%s137 + $0x170] sm:$0xff] %v912
        %1047 = vst [vmem:[%s137 + $0x178] sm:$0xff] %v917
        %1048 = vst [vmem:[%s137 + $0x180] sm:$0xff] %v922
        %1049 = vst [vmem:[%s137 + $0x188] sm:$0xff] %v927
        %1050 = vst [vmem:[%s137 + $0x190] sm:$0xff] %v932
        %1051 = vst [vmem:[%s137 + $0x198] sm:$0xff] %v937
        %1052 = vst [vmem:[%s137 + $0x1a0] sm:$0xff] %v942
        %1053 = vst [vmem:[%s137 + $0x1a8] sm:$0xff] %v947
        %1054 = vst [vmem:[%s137 + $0x1b0] sm:$0xff] %v952
        %1055 = vst [vmem:[%s137 + $0x1b8] sm:$0xff] %v957
        %1056 = vst [vmem:[%s137 + $0x1c0] sm:$0xff] %v962
        %1057 = vst [vmem:[%s137 + $0x1c8] sm:$0xff] %v967
        %1058 = vst [vmem:[%s137 + $0x1d0] sm:$0xff] %v972
        %1059 = vst [vmem:[%s137 + $0x1d8] sm:$0xff] %v977
        %1060 = vst [vmem:[%s137 + $0x1e0] sm:$0xff] %v982
        %1061 = vst [vmem:[%s137 + $0x1e8] sm:$0xff] %v987
        %1062 = vst [vmem:[%s137 + $0x1f0] sm:$0xff] %v992
        %1063 = vst [vmem:[%s137 + $0x1f8] sm:$0xff] %v997
        %s1064 = sand.u32 %s71, 1
        %s1065 = scalar_lea.sflag [#allocation3], %s1064
        %s1066 = sand.u32 %s71, 1
        %s1067 = smul.addr %s1066, 512
        %s1068 = scalar_lea.vmem [#allocation2], %s1067
        // Predicated region
        $region29: #{tpu_custom_call.1} parent=27 // pred_check
          %p1069 = pneg %p81
        $region30: #{tpu_custom_call.1} parent=27 // pred_check_branch
          %1071 = sbr.rel (%p1069) target = $region32
        $region31: #{tpu_custom_call.1} parent=27 // pred_region
          %s1072 = smul.u32 64, %s16
          %s1073 = ssub.s32 125, %s1072
          %p1074 = scmp.lt.s32.totalorder %s1073, 64
          %s1075 = scalar_select %p1074, %s1073, 64
          %s1076 = smul.u32 128, %s1075
          %s1078 = ssub.s32 8192, %s1076
          %1079 = vsyncadd %s1065, %s1078
          %p1080 = scmp.ne.s32.totalorder 0, %s1076
          %s1081 = smul.addr %s1072, 128
          %s1082 = scalar_lea.hbm %s2, %s1081
          %s1083 = smul.u32 8, %s1075
          %s1084 = sshll.u32 %s1068, 4
          %s1085 = int_to_ptr.vmem [resolvable:$true] %s1084
          %s1086 = sshll.u32 %s1083, 4
          %1090 = dma.vmem_to_hbm [thread:$0]  (%p1080), %s1085, %s1086, %s1082, %s1065, 128, 128, 8
        $region32: #{tpu_custom_call.1} parent=27 // pred_fallthru
          _
      $region28: #{tpu_custom_call.1} parent=5 // pred_fallthru
        _
      %p1091 = scmp.le.s32.totalorder 2, %s11
      // Predicated region
      $region33: #{tpu_custom_call.1} parent=5 // pred_check
        %p1092 = pneg %p1091
      $region34: #{tpu_custom_call.1} parent=5 // pred_check_branch
        %1094 = sbr.rel (%p1092) target = $region36
      $region35: #{tpu_custom_call.1} parent=5 // pred_region
        %s1095 = ssub.s32 %s11, 2
        // Predicated region
        $region37: #{tpu_custom_call.1} parent=35 // pred_check
          %p1096 = pneg %p87
        $region38: #{tpu_custom_call.1} parent=35 // pred_check_branch
          %1098 = sbr.rel (%p1096) target = $region40
        $region39: #{tpu_custom_call.1} parent=35 // pred_region
          %s1099 = sand.u32 %s72, 1
          %s1100 = scalar_lea.sflag [#allocation3], %s1099
          %s1101 = sand.u32 %s72, 1
          %s1102 = smul.addr %s1101, 512
          %s1103 = scalar_lea.vmem [#allocation2], %s1102
          %1104 = dma.done %s1100, 8192
        $region40: #{tpu_custom_call.1} parent=35 // pred_fallthru
          _
      $region36: #{tpu_custom_call.1} parent=5 // pred_fallthru
        _
    $region6: #{tpu_custom_call.1} parent=1 // loop_footer
      %s15 = sadd.s32 1, %s11
    $region7: #{tpu_custom_call.1} parent=1 // loop_footer_branch
      %10 = sbr.rel target = $region3
    $region8: #{tpu_custom_call.1} parent=1 // loop_exit
      _
    %1105 = vsyncpa [#allocation3], 1
    %s1106 = scalar_lea.sflag [#allocation3], 1
    %1107 = vsyncpa %s1106, 1

</llo_original>
